<compile_context>
chip_gen: v5e
topology: v5e:2x2
jax: 0.10.0
libtpu: 0.0.40
codegen_flags: <defaults>
</compile_context>

<pallas_src>
import functools

import jax
import jax.numpy as jnp
from jax.experimental import pallas as pl
from jax.experimental.pallas import tpu as pltpu


# ---------------------------------------------------------------------------
# Parameter / buffer construction (matches nn.Module.__init__)
# ---------------------------------------------------------------------------
def make_pe_table(d: int, max_len: int = 5000) -> jnp.ndarray:
    """(max_len, d) sinusoidal table (the module stores (max_len, 1, d); the batch
    axis is broadcast inside the kernel / wrapper instead)."""
    pos = jnp.arange(0, max_len, dtype=jnp.float32)[:, None]
    div_term = jnp.exp(jnp.arange(0, d, 2, dtype=jnp.float32) * (-jnp.log(10000.0) / d))
    pe = jnp.zeros((max_len, d), dtype=jnp.float32)
    pe = pe.at[:, 0::2].set(jnp.sin(pos * div_term))
    pe = pe.at[:, 1::2].set(jnp.cos(pos * div_term))
    return pe


# ---------------------------------------------------------------------------
# Kernel bodies (shared by all layout paths)
# ---------------------------------------------------------------------------
def _pe_add_kernel(x_ref, pe_ref, o_ref):
    # pe_ref is either the same shape as x_ref or has a size-1 batch axis;
    # jnp broadcasting handles both without a relayout.
    o_ref[...] = x_ref[...] + pe_ref[...]


def _pe_add_dropout_bits_kernel(x_ref, pe_ref, bits_ref, o_ref, *, thresh, scale):
    # Portable dropout: random bits are generated outside the kernel (works on
    # CPU / interpret mode as well as TPU).
    y = x_ref[...] + pe_ref[...]
    keep = bits_ref[...] >= jnp.uint32(thresh)
    o_ref[...] = jnp.where(keep, y * scale, 0.0).astype(o_ref.dtype)


def _pe_add_dropout_prng_kernel(seed_ref, x_ref, pe_ref, o_ref, *, thresh, scale,
                                grid_rank):
    # TPU-only dropout using the hardware PRNG (no extra HBM read for the mask).
    # Seed is folded with the tile indices so every tile (and every distinct host
    # seed) gets an independent stream.
    if grid_rank == 2:
        pltpu.prng_seed(seed_ref[0], pl.program_id(0), pl.program_id(1))
    else:
        pltpu.prng_seed(seed_ref[0], pl.program_id(0))
    y = x_ref[...] + pe_ref[...]
    bits = pltpu.bitcast(pltpu.prng_random_bits(y.shape), jnp.uint32)
    keep = bits >= jnp.uint32(thresh)
    o_ref[...] = jnp.where(keep, y * scale, 0.0).astype(o_ref.dtype)


# ---------------------------------------------------------------------------
# Tiling helper (megacore aware)
# ---------------------------------------------------------------------------
def _round_up(x: int, m: int) -> int:
    return ((x + m - 1) // m) * m


def _choose_tile_s(S: int, row_bytes: int, target_bytes: int) -> int:
    """Sequence-tile size: multiple of 8 (or full S when S <= 8), ~target_bytes of x
    per block, and an even / near-balanced block count so v7x's two TensorCores
    both get work."""
    if S <= 8:
        return S
    rows = max(8, target_bytes // max(row_bytes, 1))
    ts = max(8, min(S, (rows // 8) * 8))
    n_blocks = -(-S // ts)
    if n_blocks == 1:
        n_blocks = 2                      # never leave a whole TC idle on v7x
    if 1 < n_blocks < 8 and (n_blocks % 2):
        n_blocks += 1                     # even count -> balanced 2-way split
    ts = min(S, _round_up(-(-S // n_blocks), 8))
    return int(ts)


# ---------------------------------------------------------------------------
# Wrapper
# ---------------------------------------------------------------------------
def positional_encoding_forward(x, pe_table, *, dropout_p: float = 0.1,
                                training: bool = False, seed: int = 0,
                                tile_bytes: int = 4 * 1024 * 1024,
                                donate_x: bool = False):
    """x: (seq_len, batch, d) -> same shape/dtype.

    tile_bytes: target bytes of x per grid step.  ~4 MiB is a good default on
    v7x; raise toward 8-16 MiB on v6e; 2-4 MiB is plenty on v5e.  The scoped
    VMEM limit is sized automatically from the chosen block.
    """
    S, B, D = x.shape
    isz = x.dtype.itemsize
    apply_dropout = bool(training) and float(dropout_p) > 0.0
    if apply_dropout and dropout_p >= 1.0:
        # nn.Dropout(p=1) zeroes everything; avoid 1/(1-p) division by zero.
        return jnp.zeros_like(x)

    # TODO(synk): PyTorch keeps pe in fp32 (type promotion computes the add in fp32);
    # we cast pe to x.dtype to halve HBM traffic for bf16 activations.
    pe_sd = pe_table[:S].astype(x.dtype)                       # (S, D)

    use_hw_prng = apply_dropout and (jax.default_backend() == "tpu")

    # ---------------- layout selection ----------------
    if B >= 8:
        # Path A: minor plane (B, D) is sublane-dense already.
        path = "A"
    elif D % 128 == 0:
        # Path B: squeeze the tiny batch out of the block -> dense (ts, D) plane.
        path = "B"
    else:
        # Path C: flatten (B, D) into the lane axis for small-D configs.
        path = "C"

    if path == "A":
        x_op = x
        pe_op = pe_sd[:, None, :]                              # (S, 1, D)
        ts = _choose_tile_s(S, B * D * isz, tile_bytes)
        grid = (pl.cdiv(S, ts),)
        dims = ("parallel",)
        x_spec = pl.BlockSpec((ts, B, D), lambda i, *_: (i, 0, 0))
        pe_spec = pl.BlockSpec((ts, 1, D), lambda i, *_: (i, 0, 0))
        out_spec = pl.BlockSpec((ts, B, D), lambda i, *_: (i, 0, 0))
        bits_spec = pl.BlockSpec((ts, B, D), lambda i, *_: (i, 0, 0))
        bits_shape = (S, B, D)
        out_shape_arr = jax.ShapeDtypeStruct((S, B, D), x.dtype)
        reshape_out = lambda o: o
        xblk_bytes, peblk_bytes = ts * B * D * isz, ts * D * isz
    elif path == "B":
        x_op = x
        pe_op = pe_sd                                          # (S, D)
        ts = _choose_tile_s(S, D * isz, tile_bytes)
        grid = (pl.cdiv(S, ts), B)                             # batch innermost -> pe block reused
        dims = ("parallel", "parallel")
        x_spec = pl.BlockSpec((ts, None, D), lambda i, b, *_: (i, b, 0))
        pe_spec = pl.BlockSpec((ts, D), lambda i, b, *_: (i, 0))
        out_spec = pl.BlockSpec((ts, None, D), lambda i, b, *_: (i, b, 0))
        bits_spec = pl.BlockSpec((ts, None, D), lambda i, b, *_: (i, b, 0))
        bits_shape = (S, B, D)
        out_shape_arr = jax.ShapeDtypeStruct((S, B, D), x.dtype)
        reshape_out = lambda o: o
        xblk_bytes, peblk_bytes = ts * D * isz, ts * D * isz
    else:  # path == "C"
        F = B * D
        x_op = x.reshape(S, F)
        # pe value for flattened index b*D + d is pe[s, d] -> tile along the last axis.
        pe_op = jnp.tile(pe_sd, (1, B))                        # (S, F); small extra read, small-D only
        ts = _choose_tile_s(S, F * isz, tile_bytes)
        grid = (pl.cdiv(S, ts),)
        dims = ("parallel",)
        x_spec = pl.BlockSpec((ts, F), lambda i, *_: (i, 0))
        pe_spec = pl.BlockSpec((ts, F), lambda i, *_: (i, 0))
        out_spec = pl.BlockSpec((ts, F), lambda i, *_: (i, 0))
        bits_spec = pl.BlockSpec((ts, F), lambda i, *_: (i, 0))
        bits_shape = (S, F)
        out_shape_arr = jax.ShapeDtypeStruct((S, F), x.dtype)
        reshape_out = lambda o: o.reshape(S, B, D)
        xblk_bytes, peblk_bytes = ts * F * isz, ts * F * isz

    # ---------------- scoped VMEM / cost estimate ----------------
    per_step_bytes = 2 * xblk_bytes + peblk_bytes
    if apply_dropout and not use_hw_prng:
        per_step_bytes += (xblk_bytes // isz) * 4              # uint32 bits block
    vmem_limit = min(2 * per_step_bytes + (4 << 20), 64 << 20)  # double-buffered + headroom
    cparams = pltpu.CompilerParams(dimension_semantics=dims,
                                   vmem_limit_bytes=int(vmem_limit))

    x_bytes = S * B * D * isz
    pe_bytes = int(pe_op.size) * isz
    bytes_accessed = 2 * x_bytes + pe_bytes
    flops = S * B * D
    if apply_dropout:
        flops = 4 * S * B * D
        if not use_hw_prng:
            bytes_accessed += S * B * D * 4
    cost = pl.CostEstimate(flops=int(flops), transcendentals=0,
                           bytes_accessed=int(bytes_accessed))

    # ---------------- eval mode (or p == 0): dropout is identity ----------------
    if not apply_dropout:
        out = pl.pallas_call(
            _pe_add_kernel,
            out_shape=out_shape_arr,
            grid_spec=pltpu.PrefetchScalarGridSpec(
                num_scalar_prefetch=0, grid=grid,
                in_specs=[x_spec, pe_spec], out_specs=out_spec),
            compiler_params=cparams,
            cost_estimate=cost,
            input_output_aliases=({0: 0} if donate_x else {}),
        )(x_op, pe_op)
        return reshape_out(out)

    # ---------------- training mode: inverted dropout ----------------
    scale = 1.0 / (1.0 - float(dropout_p))                     # python float: no dtype promotion
    thresh = min(int(float(dropout_p) * (2.0 ** 32)), 2 ** 32 - 1)

    if use_hw_prng:
        # TPU hardware PRNG: no extra HBM read for the mask.
        # TODO(synk): donate_x aliasing is not wired on this path (scalar-prefetch operand
        # shifts the input index); the mask is deterministic per (seed, tile) but will not
        # bit-match torch's RNG stream.
        seed_arr = jnp.array([int(seed) & 0x7FFFFFFF], dtype=jnp.int32)
        kernel = functools.partial(_pe_add_dropout_prng_kernel,
                                   thresh=thresh, scale=scale, grid_rank=len(grid))
        out = pl.pallas_call(
            kernel,
            out_shape=out_shape_arr,
            grid_spec=pltpu.PrefetchScalarGridSpec(
                num_scalar_prefetch=1, grid=grid,
                in_specs=[x_spec, pe_spec], out_specs=out_spec),
            compiler_params=cparams,
            cost_estimate=cost,
        )(seed_arr, x_op, pe_op)
        return reshape_out(out)

    # Portable fallback (CPU / interpret mode): pre-generated uint32 random bits.
    # TODO(synk): on a real TPU this would add an S*B*D*4-byte HBM read; the hardware-PRNG
    # branch above avoids it, but prng_seed/prng_random_bits do not lower off-TPU.
    bits = jax.random.bits(jax.random.PRNGKey(int(seed)), bits_shape, dtype=jnp.uint32)
    kernel = functools.partial(_pe_add_dropout_bits_kernel, thresh=thresh, scale=scale)
    out = pl.pallas_call(
        kernel,
        out_shape=out_shape_arr,
        grid_spec=pltpu.PrefetchScalarGridSpec(
            num_scalar_prefetch=0, grid=grid,
            in_specs=[x_spec, pe_spec, bits_spec], out_specs=out_spec),
        compiler_params=cparams,
        cost_estimate=cost,
        input_output_aliases=({0: 0} if donate_x else {}),
    )(x_op, pe_op, bits)
    return reshape_out(out)


# ---------------------------------------------------------------------------
# Main
# ---------------------------------------------------------------------------
if __name__ == "__main__":
    key = jax.random.PRNGKey(0)
    k1, k2, k3 = jax.random.split(key, 3)

    # --- case 1: small module-convention shape (seq, batch, d) -> flattened-lane path (C) ---
    S1, B1, D1 = 8, 2, 32
    x1 = jax.random.normal(k1, (S1, B1, D1), dtype=jnp.float32)
    pe1 = make_pe_table(D1, max_len=64)
    out1 = jax.block_until_ready(positional_encoding_forward(x1, pe1, training=False))
    ref1 = x1 + pe1[:S1][:, None, :]
    assert out1.shape == x1.shape and out1.dtype == x1.dtype
    assert jnp.allclose(out1, ref1, atol=1e-6, rtol=1e-6)

    # --- case 2: lane-dense squeezed-batch path (B), multi-tile with ragged last block ---
    S2, B2, D2 = 20, 2, 128
    x2 = jax.random.normal(k2, (S2, B2, D2), dtype=jnp.float32)
    pe2 = make_pe_table(D2, max_len=64)
    out2 = jax.block_until_ready(
        positional_encoding_forward(x2, pe2, training=False, tile_bytes=16 * D2 * 4))
    ref2 = x2 + pe2[:S2][:, None, :]
    assert jnp.allclose(out2, ref2, atol=1e-6, rtol=1e-6)

    # --- case 3: batch >= 8 path (A), forced 2-way S split for megacore balance ---
    S3, B3, D3 = 16, 8, 128
    x3 = jax.random.normal(k3, (S3, B3, D3), dtype=jnp.float32)
    pe3 = make_pe_table(D3, max_len=64)
    out3 = jax.block_until_ready(positional_encoding_forward(x3, pe3, training=False))
    ref3 = x3 + pe3[:S3][:, None, :]
    assert jnp.allclose(out3, ref3, atol=1e-6, rtol=1e-6)

    # --- case 4: training-mode dropout (hardware PRNG on TPU, portable bits elsewhere) ---
    p = 0.1
    out_d = jax.block_until_ready(
        positional_encoding_forward(x2, pe2, dropout_p=p, training=True, seed=123,
                                    tile_bytes=16 * D2 * 4))
    scale = 1.0 / (1.0 - p)
    ok = (out_d == 0) | jnp.isclose(out_d, ref2 * scale, atol=1e-5, rtol=1e-5)
    assert bool(jnp.all(ok))
    assert bool(jnp.any(out_d != 0))

    print("KERNEL_OK")
</pallas_src>

<mosaic_0001>
module attributes {stable_mosaic.version = 11 : i64} {
  func.func @_pe_add_kernel(%arg0: i32, %arg1: memref<8x64xf32, #tpu.memory_space<vmem>>, %arg2: memref<8x64xf32, #tpu.memory_space<vmem>>, %arg3: memref<8x64xf32, #tpu.memory_space<vmem>>) attributes {dimension_semantics = [#tpu.dimension_semantics<parallel>], iteration_bounds = array<i64: 1>, scalar_prefetch = 0 : i64, scratch_operands = 0 : i64, tpu.core_type = #tpu.core_type<tc>, window_params = [{transform_indices = @transform_0, window_bounds = array<i64: 8, 64>}, {transform_indices = @transform_1, window_bounds = array<i64: 8, 64>}, {transform_indices = @transform_2, window_bounds = array<i64: 8, 64>}]} {
    %c0 = arith.constant 0 : index
    %c0_0 = arith.constant 0 : index
    %0 = vector.load %arg1[%c0, %c0_0] : memref<8x64xf32, #tpu.memory_space<vmem>>, vector<8x64xf32>
    %c0_1 = arith.constant 0 : index
    %c0_2 = arith.constant 0 : index
    %1 = vector.load %arg2[%c0_1, %c0_2] : memref<8x64xf32, #tpu.memory_space<vmem>>, vector<8x64xf32>
    %2 = arith.addf %0, %1 : vector<8x64xf32>
    %c0_3 = arith.constant 0 : index
    %c0_4 = arith.constant 0 : index
    %3 = vector.load %arg3[%c0_3, %c0_4] : memref<8x64xf32, #tpu.memory_space<vmem>>, vector<8x64xf32>
    tpu.vector_store %arg3[%c0_3, %c0_4], %2 {strides = array<i32>} : memref<8x64xf32, #tpu.memory_space<vmem>>, vector<8x64xf32>,
    return
  }
  func.func @transform_0(%arg0: i32) -> (i32, i32) {
    %c0_i32 = arith.constant 0 : i32
    %c0_i32_0 = arith.constant 0 : i32
    return %arg0, %c0_i32 : i32, i32
  }
  func.func @transform_1(%arg0: i32) -> (i32, i32) {
    %c0_i32 = arith.constant 0 : i32
    %c0_i32_0 = arith.constant 0 : i32
    return %arg0, %c0_i32 : i32, i32
  }
  func.func @transform_2(%arg0: i32) -> (i32, i32) {
    %c0_i32 = arith.constant 0 : i32
    %c0_i32_0 = arith.constant 0 : i32
    return %arg0, %c0_i32 : i32, i32
  }
}

</mosaic_0001>

<llo_original>
// kernel: tpu_custom_call.1
$region0: #{tpu_custom_call.1}
  #allocation0 [shape = 'u32[]', space=smem, size = 0x4, offset = 0x4, fixed_abs, tag = 'smem constant byte address 0x4 - core index']
  #allocation1 [shape = 'u32[72,128]{1,0:T(1,128)}', space=vmem, size = 0x9000, scoped, tag = 'internal scratch']
  %s0 = inlined_call_operand.hbm [shape: f32[8,64], index: 0, kind: input, shape index: {}]
  %s1 = inlined_call_operand.hbm [shape: f32[8,64], index: 1, kind: input, shape index: {}]
  %s2 = inlined_call_operand.hbm [shape: f32[8,64], index: 2, kind: output, shape index: {}]
  %s3 = sld [smem:[#allocation0]]
  $region26: #{tpu_custom_call.1} parent=0
    _
  %s5 = ssub.s32 1, %s3
  %s6 = scalar_select 0, %s5, %s3
  $region1: #{tpu_custom_call.1} parent=0
    #allocation2 [shape = 'u8[4096]{0}', space=vmem, size = 0x1000, scoped, tag = 'input window, operand 0, single buffered']
    #allocation3 [shape = 's32[1]{0}', space=sflag, size = 0x4, scoped, tag = 'scoped memory for tpu_custom_call.1']
    #allocation4 [shape = 's32[1]{0}', space=sflag, size = 0x4, scoped, tag = 'scoped memory for tpu_custom_call.1']
    #allocation5 [shape = 'u8[4096]{0}', space=vmem, size = 0x1000, scoped, tag = 'input window, operand 1, single buffered']
    #allocation6 [shape = 's32[1]{0}', space=sflag, size = 0x4, scoped, tag = 'scoped memory for tpu_custom_call.1']
    #allocation7 [shape = 'u8[4096]{0}', space=vmem, size = 0x1000, scoped, tag = 'output window, operand 0, single buffered']
    %7 = vsyncpa [#allocation3], 0
    %8 = vsyncpa [#allocation6], 0
    %9 = vsyncpa [#allocation4], 0
    // Predicated region
    $region2: #{tpu_custom_call.1} parent=1 // pred_check
      _
    $region3: #{tpu_custom_call.1} parent=1 // pred_check_branch
      %11 = sbr.rel (0) target = $region5
    $region4: #{tpu_custom_call.1} parent=1 // pred_region
      %13 = vsyncadd [#allocation3], 0
      %s15 = sshll.u32 %s0, 4
      %s16 = int_to_ptr.hbm [resolvable:$true] %s15
      %s17 = sshll.u32 [#allocation2], 4
      %s18 = int_to_ptr.vmem [resolvable:$true] %s17
      %20 = dma.hbm_to_vmem [thread:$0]  %s16, 128, %s18, [#allocation3]
    $region5: #{tpu_custom_call.1} parent=1 // pred_fallthru
      _
    // Predicated region
    $region6: #{tpu_custom_call.1} parent=1 // pred_check
      _
    $region7: #{tpu_custom_call.1} parent=1 // pred_check_branch
      %22 = sbr.rel (0) target = $region9
    $region8: #{tpu_custom_call.1} parent=1 // pred_region
      %24 = vsyncadd [#allocation6], 0
      %s26 = sshll.u32 %s1, 4
      %s27 = int_to_ptr.hbm [resolvable:$true] %s26
      %s28 = sshll.u32 [#allocation5], 4
      %s29 = int_to_ptr.vmem [resolvable:$true] %s28
      %31 = dma.hbm_to_vmem [thread:$0]  %s27, 128, %s29, [#allocation6]
    $region9: #{tpu_custom_call.1} parent=1 // pred_fallthru
      _
    // Predicated region
    $region10: #{tpu_custom_call.1} parent=1 // pred_check
      _
    $region11: #{tpu_custom_call.1} parent=1 // pred_check_branch
      %33 = sbr.rel (0) target = $region13
    $region12: #{tpu_custom_call.1} parent=1 // pred_region
      %35 = dma.done [#allocation3], 128
    $region13: #{tpu_custom_call.1} parent=1 // pred_fallthru
      _
    // Predicated region
    $region14: #{tpu_custom_call.1} parent=1 // pred_check
      _
    $region15: #{tpu_custom_call.1} parent=1 // pred_check_branch
      %37 = sbr.rel (0) target = $region17
    $region16: #{tpu_custom_call.1} parent=1 // pred_region
      %39 = dma.done [#allocation6], 128
    $region17: #{tpu_custom_call.1} parent=1 // pred_fallthru
      _
    %v40 = vld [vmem:[#allocation2] sm:$0xff]
    %v41 = vld [vmem:[#allocation5] sm:$0xff]
    %v42 = vadd.f32 %v40, %v41
    %vm43 = vcmask 523264
    %44 = vst.msk [vmem:[#allocation7] sm:$0xff] %vm43, %v42
    // Predicated region
    $region18: #{tpu_custom_call.1} parent=1 // pred_check
      _
    $region19: #{tpu_custom_call.1} parent=1 // pred_check_branch
      %46 = sbr.rel (0) target = $region21
    $region20: #{tpu_custom_call.1} parent=1 // pred_region
      %48 = vsyncadd [#allocation4], 0
      %s50 = sshll.u32 [#allocation7], 4
      %s51 = int_to_ptr.vmem [resolvable:$true] %s50
      %s52 = sshll.u32 %s2, 4
      %s53 = int_to_ptr.hbm [resolvable:$true] %s52
      %55 = dma.vmem_to_hbm [thread:$0]  %s51, 128, %s53, [#allocation4]
    $region21: #{tpu_custom_call.1} parent=1 // pred_fallthru
      _
    // Predicated region
    $region22: #{tpu_custom_call.1} parent=1 // pred_check
      _
    $region23: #{tpu_custom_call.1} parent=1 // pred_check_branch
      %57 = sbr.rel (0) target = $region25
    $region24: #{tpu_custom_call.1} parent=1 // pred_region
      %59 = dma.done [#allocation4], 128
    $region25: #{tpu_custom_call.1} parent=1 // pred_fallthru
      _
    %60 = vsyncpa [#allocation3], 1
    %61 = vsyncpa [#allocation6], 1
    %62 = vsyncpa [#allocation4], 1

</llo_original>
